<compile_context>
chip_gen: v5e
topology: v5e:2x2
jax: 0.10.0
libtpu: 0.0.40
codegen_flags: <defaults>
</compile_context>

<pallas_src>
import functools

import jax
import jax.numpy as jnp
from jax.experimental import pallas as pl
from jax.experimental.pallas import tpu as pltpu


LANE = 128  # TPU vreg lane width


def _round_up(n, m):
    return ((n + m - 1) // m) * m


def pack_head_weights(wk, wq, wv):
    """Pack (C,H) key/query/value weights into one lane-aligned (C, 3*padh) slab.

    Each projection is zero-padded to a multiple of 128 lanes so the in-kernel
    k/q/v slices are vreg-aligned.  The attention scale C**-0.5 (embedding dim,
    as in the PyTorch forward) is folded into the query columns at pack time.
    """
    C, H = wk.shape
    padh = _round_up(H, LANE)
    scale = jnp.asarray(C, jnp.float32) ** -0.5

    def pad(w):
        return jnp.pad(w, ((0, 0), (0, padh - H)))

    return jnp.concatenate([pad(wk), pad(wq * scale), pad(wv)], axis=1)


def causal_block_bias(B, T, dtype=jnp.float32):
    """(B*T, B*T) additive bias for batch-flattened attention.

    0 where attention is allowed (same batch element AND key pos <= query pos),
    -1e30 elsewhere.  Every row keeps its diagonal, so no fully-masked rows.
    Computed once at init time; the kernel just adds it.
    """
    idx = jnp.arange(B * T)
    b, t = idx // T, idx % T
    allowed = (b[:, None] == b[None, :]) & (t[:, None] >= t[None, :])
    return jnp.where(allowed, 0.0, -1e30).astype(dtype)


def head_kernel(x_ref, w_ref, bias_ref, o_ref, *, matmul_dtype):
    B, T, H = o_ref.shape
    BT = B * T
    C = x_ref.shape[-1]
    padh = w_ref.shape[1] // 3

    def mxu(a, b, contract_b_axis):
        # Contract a's last axis with the given axis of b; accumulate in f32.
        return jax.lax.dot_general(
            a.astype(matmul_dtype), b.astype(matmul_dtype),
            (((1,), (contract_b_axis,)), ((), ())),
            preferred_element_type=jnp.float32)

    # Fused, lane-padded QKV projection: one MXU matmul on (B*T, C).
    x2 = x_ref[...].reshape(BT, C)
    kqv = mxu(x2, w_ref[...], 0)             # (BT, 3*padh)
    k = kqv[:, 0 * padh:1 * padh]            # vreg-aligned (128-lane) slices
    q = kqv[:, 1 * padh:2 * padh]            # C**-0.5 already folded in
    v = kqv[:, 2 * padh:3 * padh]

    # Scores: ONE (BT, BT) matmul contracting the head axes (k is never
    # transposed); zero-padded lanes contribute nothing to the contraction.
    wei = mxu(q, k, 1)                       # (BT, BT)

    # Static causal + block-diagonal(batch) mask as a single additive bias.
    wei = wei + bias_ref[...]

    # Numerically stable softmax; every row keeps its diagonal -> finite max,
    # masked entries underflow to exactly 0 in exp.  Elementwise path is f32.
    wei = wei - jnp.max(wei, axis=-1, keepdims=True)
    p = jnp.exp(wei)
    s = jnp.sum(p, axis=-1, keepdims=True)
    p = p * pl.reciprocal(s, approx=False)   # no VALU divide, no Newton muls

    # Dropout on p: eval-mode identity (see TODO at top).

    # (BT, BT) @ (BT, padh) -> (BT, padh); store the (B, T, H) result directly
    # (no post-kernel slice / extra HBM round trip of the padded buffer).
    out = mxu(p, v, 0)
    o_ref[...] = out[:, :H].reshape(B, T, H).astype(o_ref.dtype)


def head_forward(x, w_cat, bias, head_size, matmul_dtype=jnp.float32):
    """x: (B,T,C) f32; w_cat: (C, 3*padh) packed weights; bias: (B*T, B*T).

    Returns (B, T, head_size).  Single pallas_call, single grid step.
    """
    B, T, C = x.shape
    padh = w_cat.shape[1] // 3
    kernel = functools.partial(head_kernel, matmul_dtype=matmul_dtype)
    return pl.pallas_call(
        kernel,
        out_shape=jax.ShapeDtypeStruct((B, T, head_size), x.dtype),
        grid=(1,),
        in_specs=[
            pl.BlockSpec((B, T, C), lambda i: (0, 0, 0)),
            pl.BlockSpec((C, 3 * padh), lambda i: (0, 0)),
            pl.BlockSpec((B * T, B * T), lambda i: (0, 0)),
        ],
        out_specs=pl.BlockSpec((B, T, head_size), lambda i: (0, 0, 0)),
        compiler_params=pltpu.CompilerParams(
            dimension_semantics=("arbitrary",)),
    )(x, w_cat, bias)


def head_reference(x, wk, wq, wv):
    """Pure-JAX reference (unpacked weights), mirrors the PyTorch forward."""
    B, T, C = x.shape
    k = x @ wk
    q = x @ wq
    v = x @ wv
    wei = jnp.einsum("btd,bsd->bts", q, k) * (C ** -0.5)
    mask = jnp.tril(jnp.ones((T, T), dtype=bool))
    wei = jnp.where(mask, wei, -jnp.inf)
    wei = jax.nn.softmax(wei, axis=-1)
    return jnp.einsum("bts,bsd->btd", wei, v)


if __name__ == "__main__":
    # Shapes consistent with the module: block_size=8, n_embed=32, head_size=16.
    B, T, C, H = 2, 8, 32, 16

    key = jax.random.PRNGKey(0)
    kx, kk, kq, kv = jax.random.split(key, 4)

    x = jax.random.normal(kx, (B, T, C), dtype=jnp.float32)
    # Deterministic "Linear(n_embed, head_size, bias=False)" weights,
    # stored transposed as (C, H) for direct x @ W.
    bound = 1.0 / (C ** 0.5)
    wk = jax.random.uniform(kk, (C, H), jnp.float32, -bound, bound)
    wq = jax.random.uniform(kq, (C, H), jnp.float32, -bound, bound)
    wv = jax.random.uniform(kv, (C, H), jnp.float32, -bound, bound)

    # One-time packing / mask construction (init-time in a real model).
    w_cat = pack_head_weights(wk, wq, wv)
    bias = causal_block_bias(B, T)

    ref = head_reference(x, wk, wq, wv)

    # f32 MXU path (default; matches the PyTorch module's f32 numerics).
    out = jax.block_until_ready(head_forward(x, w_cat, bias, head_size=H))
    assert out.shape == (B, T, H)
    assert jnp.allclose(out, ref, atol=1e-4, rtol=1e-4), "f32 kernel mismatch"

    # bf16 MXU-input path (recommended matmul default on v6e/v5e before scaling
    # T); softmax/elementwise stays f32.  A C=32 contraction in bf16 sits
    # outside 1e-4, so this path is verified at a bf16-appropriate tolerance.
    out_bf16 = jax.block_until_ready(
        head_forward(x, w_cat, bias, head_size=H, matmul_dtype=jnp.bfloat16))
    assert jnp.allclose(out_bf16, ref, atol=5e-2, rtol=5e-2), "bf16 kernel mismatch"

    print("KERNEL_OK")
</pallas_src>

<mosaic_0001>
module attributes {stable_mosaic.version = 11 : i64} {
  func.func @head_kernel(%arg0: i32, %arg1: memref<2x8x32xf32, #tpu.memory_space<vmem>>, %arg2: memref<32x384xf32, #tpu.memory_space<vmem>>, %arg3: memref<16x16xf32, #tpu.memory_space<vmem>>, %arg4: memref<2x8x16xf32, #tpu.memory_space<vmem>>) attributes {dimension_semantics = [#tpu.dimension_semantics<arbitrary>], iteration_bounds = array<i64: 1>, scalar_prefetch = 0 : i64, scratch_operands = 0 : i64, tpu.core_type = #tpu.core_type<tc>, window_params = [{pipeline_mode = #tpu.pipeline_mode<synchronous>, transform_indices = @transform_0, window_bounds = array<i64: 2, 8, 32>}, {pipeline_mode = #tpu.pipeline_mode<synchronous>, transform_indices = @transform_1, window_bounds = array<i64: 32, 384>}, {pipeline_mode = #tpu.pipeline_mode<synchronous>, transform_indices = @transform_2, window_bounds = array<i64: 16, 16>}, {pipeline_mode = #tpu.pipeline_mode<synchronous>, transform_indices = @transform_3, window_bounds = array<i64: 2, 8, 16>}]} {
    %c0 = arith.constant 0 : index
    %c0_0 = arith.constant 0 : index
    %c0_1 = arith.constant 0 : index
    %0 = vector.load %arg1[%c0, %c0_0, %c0_1] : memref<2x8x32xf32, #tpu.memory_space<vmem>>, vector<2x8x32xf32>
    %1 = vector.shape_cast %0 : vector<2x8x32xf32> to vector<16x32xf32>
    %c0_2 = arith.constant 0 : index
    %c0_3 = arith.constant 0 : index
    %2 = vector.load %arg2[%c0_2, %c0_3] : memref<32x384xf32, #tpu.memory_space<vmem>>, vector<32x384xf32>
    %cst = arith.constant dense<0.000000e+00> : vector<16x384xf32>
    %3 = tpu.matmul %1, %2, %cst {dimension_numbers = #tpu.dot_dimension_numbers<[1], [0], [0], [1], [0, 0, 1, 1], [], []>} : vector<16x32xf32>, vector<32x384xf32>, vector<16x384xf32> -> vector<16x384xf32>
    %4 = vector.extract_strided_slice %3 {offsets = [0, 0], sizes = [16, 128], strides = [1, 1]} : vector<16x384xf32> to vector<16x128xf32>
    %5 = vector.extract_strided_slice %3 {offsets = [0, 128], sizes = [16, 128], strides = [1, 1]} : vector<16x384xf32> to vector<16x128xf32>
    %6 = vector.extract_strided_slice %3 {offsets = [0, 256], sizes = [16, 128], strides = [1, 1]} : vector<16x384xf32> to vector<16x128xf32>
    %cst_4 = arith.constant dense<0.000000e+00> : vector<16x16xf32>
    %7 = tpu.matmul %5, %4, %cst_4 {dimension_numbers = #tpu.dot_dimension_numbers<[1], [1], [0], [0], [0, 0, 1, 0], [], []>} : vector<16x128xf32>, vector<16x128xf32>, vector<16x16xf32> -> vector<16x16xf32>
    %c0_5 = arith.constant 0 : index
    %c0_6 = arith.constant 0 : index
    %8 = vector.load %arg3[%c0_5, %c0_6] : memref<16x16xf32, #tpu.memory_space<vmem>>, vector<16x16xf32>
    %9 = arith.addf %7, %8 : vector<16x16xf32>
    %cst_7 = arith.constant dense<0xFF800000> : vector<16xf32>
    %10 = vector.multi_reduction <maximumf>, %9, %cst_7 [1] : vector<16x16xf32> to vector<16xf32>
    %11 = vector.shape_cast %10 : vector<16xf32> to vector<16x1xf32>
    %12 = vector.broadcast %11 : vector<16x1xf32> to vector<16x16xf32>
    %13 = arith.subf %9, %12 : vector<16x16xf32>
    %14 = math.exp %13 : vector<16x16xf32>
    %cst_8 = arith.constant dense<0.000000e+00> : vector<16xf32>
    %15 = vector.multi_reduction <add>, %14, %cst_8 [1] : vector<16x16xf32> to vector<16xf32>
    %16 = vector.shape_cast %15 : vector<16xf32> to vector<16x1xf32>
    %17 = tpu.reciprocal %16 : vector<16x1xf32> -> vector<16x1xf32>
    %18 = vector.broadcast %17 : vector<16x1xf32> to vector<16x16xf32>
    %19 = arith.mulf %14, %18 : vector<16x16xf32>
    %cst_9 = arith.constant dense<0.000000e+00> : vector<16x128xf32>
    %20 = tpu.matmul %19, %6, %cst_9 {dimension_numbers = #tpu.dot_dimension_numbers<[1], [0], [0], [1], [0, 0, 1, 1], [], []>} : vector<16x16xf32>, vector<16x128xf32>, vector<16x128xf32> -> vector<16x128xf32>
    %21 = vector.extract_strided_slice %20 {offsets = [0, 0], sizes = [16, 16], strides = [1, 1]} : vector<16x128xf32> to vector<16x16xf32>
    %22 = vector.shape_cast %21 : vector<16x16xf32> to vector<2x8x16xf32>
    %c0_10 = arith.constant 0 : index
    %c0_11 = arith.constant 0 : index
    %c0_12 = arith.constant 0 : index
    %23 = vector.load %arg4[%c0_10, %c0_11, %c0_12] : memref<2x8x16xf32, #tpu.memory_space<vmem>>, vector<2x8x16xf32>
    tpu.vector_store %arg4[%c0_10, %c0_11, %c0_12], %22 {strides = array<i32>} : memref<2x8x16xf32, #tpu.memory_space<vmem>>, vector<2x8x16xf32>,
    return
  }
  func.func @transform_0(%arg0: i32) -> (i32, i32, i32) {
    %c0_i32 = arith.constant 0 : i32
    %c0_i32_0 = arith.constant 0 : i32
    %c0_i32_1 = arith.constant 0 : i32
    %c0_i32_2 = arith.constant 0 : i32
    return %c0_i32, %c0_i32_0, %c0_i32_1 : i32, i32, i32
  }
  func.func @transform_1(%arg0: i32) -> (i32, i32) {
    %c0_i32 = arith.constant 0 : i32
    %c0_i32_0 = arith.constant 0 : i32
    %c0_i32_1 = arith.constant 0 : i32
    return %c0_i32, %c0_i32_0 : i32, i32
  }
  func.func @transform_2(%arg0: i32) -> (i32, i32) {
    %c0_i32 = arith.constant 0 : i32
    %c0_i32_0 = arith.constant 0 : i32
    %c0_i32_1 = arith.constant 0 : i32
    return %c0_i32, %c0_i32_0 : i32, i32
  }
  func.func @transform_3(%arg0: i32) -> (i32, i32, i32) {
    %c0_i32 = arith.constant 0 : i32
    %c0_i32_0 = arith.constant 0 : i32
    %c0_i32_1 = arith.constant 0 : i32
    %c0_i32_2 = arith.constant 0 : i32
    return %c0_i32, %c0_i32_0, %c0_i32_1 : i32, i32, i32
  }
}

</mosaic_0001>

<llo_original>
// kernel: tpu_custom_call.1
$region0: #{tpu_custom_call.1}
  #allocation0 [shape = 'u32[]', space=smem, size = 0x4, offset = 0x4, fixed_abs, tag = 'smem constant byte address 0x4 - core index']
  #allocation1 [shape = 'u32[72,128]{1,0:T(1,128)}', space=vmem, size = 0x9000, scoped, tag = 'internal scratch']
  %s0 = inlined_call_operand.hbm [shape: f32[2,8,32], index: 0, kind: input, shape index: {}]
  %s1 = inlined_call_operand.hbm [shape: f32[32,384], index: 1, kind: input, shape index: {}]
  %s2 = inlined_call_operand.hbm [shape: f32[16,16], index: 2, kind: input, shape index: {}]
  %s3 = inlined_call_operand.hbm [shape: f32[2,8,16], index: 3, kind: output, shape index: {}]
  %s4 = sld [smem:[#allocation0]]
  $region34: #{tpu_custom_call.1} parent=0
    _
  %s6 = ssub.s32 1, %s4
  %s7 = scalar_select 0, %s6, %s4
  $region1: #{tpu_custom_call.1} parent=0
    #allocation2 [shape = 'u8[8192]{0}', space=vmem, size = 0x2000, scoped, tag = 'input window, operand 0, single buffered']
    #allocation3 [shape = 's32[1]{0}', space=sflag, size = 0x4, scoped, tag = 'scoped memory for tpu_custom_call.1']
    #allocation4 [shape = 's32[1]{0}', space=sflag, size = 0x4, scoped, tag = 'scoped memory for tpu_custom_call.1']
    #allocation5 [shape = 'u8[49152]{0}', space=vmem, size = 0xc000, scoped, tag = 'input window, operand 1, single buffered']
    #allocation6 [shape = 's32[1]{0}', space=sflag, size = 0x4, scoped, tag = 'scoped memory for tpu_custom_call.1']
    #allocation7 [shape = 'u8[8192]{0}', space=vmem, size = 0x2000, scoped, tag = 'input window, operand 2, single buffered']
    #allocation8 [shape = 'u8[8192]{0}', space=vmem, size = 0x2000, scoped, tag = 'output window, operand 0, single buffered']
    %8 = vsyncpa [#allocation3], 0
    %9 = vsyncpa [#allocation6], 0
    %10 = vsyncpa [#allocation4], 0
    // Predicated region
    $region2: #{tpu_custom_call.1} parent=1 // pred_check
      _
    $region3: #{tpu_custom_call.1} parent=1 // pred_check_branch
      %12 = sbr.rel (0) target = $region5
    $region4: #{tpu_custom_call.1} parent=1 // pred_region
      %14 = vsyncadd [#allocation3], 0
      %s15 = sshll.u32 %s0, 4
      %s16 = int_to_ptr.hbm [resolvable:$true] %s15
      %s17 = sshll.u32 [#allocation2], 4
      %s18 = int_to_ptr.vmem [resolvable:$true] %s17
      %23 = dma.hbm_to_vmem [thread:$0]  %s16, 256, %s18, [#allocation3], 128, 128, 8
    $region5: #{tpu_custom_call.1} parent=1 // pred_fallthru
      _
    // Predicated region
    $region6: #{tpu_custom_call.1} parent=1 // pred_check
      _
    $region7: #{tpu_custom_call.1} parent=1 // pred_check_branch
      %25 = sbr.rel (0) target = $region9
    $region8: #{tpu_custom_call.1} parent=1 // pred_region
      %27 = vsyncadd [#allocation6], 0
      %s28 = sshll.u32 %s1, 4
      %s29 = int_to_ptr.hbm [resolvable:$true] %s28
      %s30 = sshll.u32 [#allocation5], 4
      %s31 = int_to_ptr.vmem [resolvable:$true] %s30
      %36 = dma.hbm_to_vmem [thread:$0]  %s29, 1536, %s31, [#allocation6], 384, 384, 24
    $region9: #{tpu_custom_call.1} parent=1 // pred_fallthru
      _
    // Predicated region
    $region10: #{tpu_custom_call.1} parent=1 // pred_check
      _
    $region11: #{tpu_custom_call.1} parent=1 // pred_check_branch
      %38 = sbr.rel (0) target = $region13
    $region12: #{tpu_custom_call.1} parent=1 // pred_region
      %40 = vsyncadd [#allocation6], 0
      %s41 = sshll.u32 %s2, 4
      %s42 = int_to_ptr.hbm [resolvable:$true] %s41
      %s43 = sshll.u32 [#allocation7], 4
      %s44 = int_to_ptr.vmem [resolvable:$true] %s43
      %49 = dma.hbm_to_vmem [thread:$0]  %s42, 256, %s44, [#allocation6], 128, 128, 8
    $region13: #{tpu_custom_call.1} parent=1 // pred_fallthru
      _
    // Predicated region
    $region14: #{tpu_custom_call.1} parent=1 // pred_check
      _
    $region15: #{tpu_custom_call.1} parent=1 // pred_check_branch
      %51 = sbr.rel (0) target = $region17
    $region16: #{tpu_custom_call.1} parent=1 // pred_region
      %53 = dma.done [#allocation3], 256
    $region17: #{tpu_custom_call.1} parent=1 // pred_fallthru
      _
    // Predicated region
    $region18: #{tpu_custom_call.1} parent=1 // pred_check
      _
    $region19: #{tpu_custom_call.1} parent=1 // pred_check_branch
      %55 = sbr.rel (0) target = $region21
    $region20: #{tpu_custom_call.1} parent=1 // pred_region
      %57 = dma.done [#allocation6], 1536
    $region21: #{tpu_custom_call.1} parent=1 // pred_fallthru
      _
    // Predicated region
    $region22: #{tpu_custom_call.1} parent=1 // pred_check
      _
    $region23: #{tpu_custom_call.1} parent=1 // pred_check_branch
      %59 = sbr.rel (0) target = $region25
    $region24: #{tpu_custom_call.1} parent=1 // pred_region
      %61 = dma.done [#allocation6], 256
    $region25: #{tpu_custom_call.1} parent=1 // pred_fallthru
      _
    %v62 = vld [vmem:[#allocation2] sm:$0xff]
    %v63 = vld [vmem:[#allocation2 + $0x8] sm:$0xff]
    %v64 = vld [vmem:[#allocation5] sm:$0xff]
    %v65 = vld [vmem:[#allocation5 + $0x8] sm:$0xff]
    %v66 = vld [vmem:[#allocation5 + $0x10] sm:$0xff]
    %v67 = vld [vmem:[#allocation5 + $0x18] sm:$0xff]
    %v68 = vld [vmem:[#allocation5 + $0x20] sm:$0xff]
    %v69 = vld [vmem:[#allocation5 + $0x28] sm:$0xff]
    %v70 = vld [vmem:[#allocation5 + $0x30] sm:$0xff]
    %v71 = vld [vmem:[#allocation5 + $0x38] sm:$0xff]
    %v72 = vld [vmem:[#allocation5 + $0x40] sm:$0xff]
    %v73 = vld [vmem:[#allocation5 + $0x48] sm:$0xff]
    %v74 = vld [vmem:[#allocation5 + $0x50] sm:$0xff]
    %v75 = vld [vmem:[#allocation5 + $0x58] sm:$0xff]
    %vm76 = vcmask 261120
    %v78 = vsel %vm76, %v62, 0
    %v81 = vsel %vm76, %v63, 0
    %83 = vmatpush.msra.mxu0 0.0
    %84 = vmatpush.msra.mxu0 0.0
    %85 = vmatpush.msra.mxu0 0.0
    %86 = vmatpush.msra.mxu0 0.0
    %87 = vmatpush.msra.mxu0 0.0
    %88 = vmatpush.msra.mxu0 0.0
    %89 = vmatpush.msra.mxu0 0.0
    %90 = vmatpush.msra.mxu0 0.0
    %91 = vmatpush.msra.mxu0 0.0
    %92 = vmatpush.msra.mxu0 0.0
    %93 = vmatpush.msra.mxu0 0.0
    %94 = vmatpush.msra.mxu0 0.0
    %95 = vmatpush.msra.mxu0 %v73
    %96 = vmatpush.msra.mxu0 %v70
    %97 = vmatpush.msra.mxu0 %v67
    %98 = vmatpush.msra.mxu0 %v64
    %99 = vmatmul.f32.gmra.mxu0 %v78
    %v100 = vpop.f32.mrf.mxu0
    %v101 = vadd.f32 0.0, %v100
    %102 = vmatmul.f32.gmra.mxu0 %v81
    %v103 = vpop.f32.mrf.mxu0
    %v104 = vadd.f32 0.0, %v103
    %105 = vdwg.mxu0
    %106 = vmatpush.msra.mxu0 0.0
    %107 = vmatpush.msra.mxu0 0.0
    %108 = vmatpush.msra.mxu0 0.0
    %109 = vmatpush.msra.mxu0 0.0
    %110 = vmatpush.msra.mxu0 0.0
    %111 = vmatpush.msra.mxu0 0.0
    %112 = vmatpush.msra.mxu0 0.0
    %113 = vmatpush.msra.mxu0 0.0
    %114 = vmatpush.msra.mxu0 0.0
    %115 = vmatpush.msra.mxu0 0.0
    %116 = vmatpush.msra.mxu0 0.0
    %117 = vmatpush.msra.mxu0 0.0
    %118 = vmatpush.msra.mxu0 %v74
    %119 = vmatpush.msra.mxu0 %v71
    %120 = vmatpush.msra.mxu0 %v68
    %121 = vmatpush.msra.mxu0 %v65
    %122 = vmatmul.f32.gmra.mxu0 %v78
    %v123 = vpop.f32.mrf.mxu0
    %v124 = vadd.f32 0.0, %v123
    %125 = vmatmul.f32.gmra.mxu0 %v81
    %v126 = vpop.f32.mrf.mxu0
    %v127 = vadd.f32 0.0, %v126
    %128 = vdwg.mxu0
    %129 = vmatpush.msra.mxu0 0.0
    %130 = vmatpush.msra.mxu0 0.0
    %131 = vmatpush.msra.mxu0 0.0
    %132 = vmatpush.msra.mxu0 0.0
    %133 = vmatpush.msra.mxu0 0.0
    %134 = vmatpush.msra.mxu0 0.0
    %135 = vmatpush.msra.mxu0 0.0
    %136 = vmatpush.msra.mxu0 0.0
    %137 = vmatpush.msra.mxu0 0.0
    %138 = vmatpush.msra.mxu0 0.0
    %139 = vmatpush.msra.mxu0 0.0
    %140 = vmatpush.msra.mxu0 0.0
    %141 = vmatpush.msra.mxu0 %v75
    %142 = vmatpush.msra.mxu0 %v72
    %143 = vmatpush.msra.mxu0 %v69
    %144 = vmatpush.msra.mxu0 %v66
    %145 = vmatmul.f32.gmra.mxu0 %v78
    %v146 = vpop.f32.mrf.mxu0
    %v147 = vadd.f32 0.0, %v146
    %148 = vmatmul.f32.gmra.mxu0 %v81
    %v149 = vpop.f32.mrf.mxu0
    %v150 = vadd.f32 0.0, %v149
    %151 = vdwg.mxu0
    %v152 = vld [vmem:[#allocation7] sm:$0xff]
    %v153 = vld [vmem:[#allocation7 + $0x8] sm:$0xff]
    %154 = vmatpush.xpose.msra.mxu0 0.0
    %155 = vmatpush.xpose.msra.mxu0 0.0
    %156 = vmatpush.xpose.msra.mxu0 0.0
    %157 = vmatpush.xpose.msra.mxu0 0.0
    %158 = vmatpush.xpose.msra.mxu0 0.0
    %159 = vmatpush.xpose.msra.mxu0 0.0
    %160 = vmatpush.xpose.msra.mxu0 0.0
    %161 = vmatpush.xpose.msra.mxu0 0.0
    %162 = vmatpush.xpose.msra.mxu0 0.0
    %163 = vmatpush.xpose.msra.mxu0 0.0
    %164 = vmatpush.xpose.msra.mxu0 0.0
    %165 = vmatpush.xpose.msra.mxu0 0.0
    %166 = vmatpush.xpose.msra.mxu0 0.0
    %167 = vmatpush.xpose.msra.mxu0 0.0
    %168 = vmatpush.xpose.msra.mxu0 %v104
    %169 = vmatpush.xpose.msra.mxu0 %v101
    %170 = vmatmul.f32.gmra.mxu0 %v124
    %v171 = vpop.f32.mrf.mxu0
    %v172 = vadd.f32 %v152, %v171
    %173 = vmatmul.f32.gmra.mxu0 %v127
    %v174 = vpop.f32.mrf.mxu0
    %v175 = vadd.f32 %v153, %v174
    %176 = vdwg.mxu0
    %vm177 = vcmask 130048
    %v178 = vsel %vm177, %v172, -inf
    %179 = vmax.xlane.f32.xlu0 %v178
    %v180 = vpop.xlane.xlu0 %179
    %v181 = vsel %vm177, %v175, -inf
    %182 = vmax.xlane.f32.xlu0 %v181
    %v183 = vpop.xlane.xlu0 %182
    %v184 = vsub.f32 %v172, %v180
    %v185 = vsub.f32 %v175, %v183
    %v186 = vmul.f32 %v184, 1.442695
    %v187 = vpow.pop %v186
    %v188 = vmul.f32 %v185, 1.442695
    %v189 = vpow.pop %v188
    %v190 = vsel %vm177, %v187, 0.0
    %191 = vadd.xlane.f32.xlu0 %v190
    %v192 = vpop.xlane.xlu0 %191
    %v193 = vsel %vm177, %v189, 0.0
    %194 = vadd.xlane.f32.xlu0 %v193
    %v195 = vpop.xlane.xlu0 %194
    %v196 = vrcp.pop %v192
    %v197 = vmul.f32 %v192, %v196
    %v198 = vsub.f32 1.0, %v197
    %v199 = vmul.f32 %v196, %v198
    %v200 = vadd.f32 %v196, %v199
    %vm201 = vweird.f32 %v192
    %vm202 = vweird.f32 %v196
    %vm203 = vmor %vm201, %vm202
    %v204 = vsel %vm203, %v196, %v200
    %v205 = vand.u32 2147483647, %v192
    %vm206 = vcmp.eq.f32.partialorder %v205, 8.507059e+37
    %v207 = vand.u32 %v192, 2147483648
    %v208 = vor.u32 1.1754944e-38, %v207
    %v209 = vsel %vm206, %v208, %v204
    %v210 = vrcp.pop %v195
    %v211 = vmul.f32 %v195, %v210
    %v212 = vsub.f32 1.0, %v211
    %v213 = vmul.f32 %v210, %v212
    %v214 = vadd.f32 %v210, %v213
    %vm215 = vweird.f32 %v195
    %vm216 = vweird.f32 %v210
    %vm217 = vmor %vm215, %vm216
    %v218 = vsel %vm217, %v210, %v214
    %v219 = vand.u32 2147483647, %v195
    %vm220 = vcmp.eq.f32.partialorder %v219, 8.507059e+37
    %v221 = vand.u32 %v195, 2147483648
    %v222 = vor.u32 1.1754944e-38, %v221
    %v223 = vsel %vm220, %v222, %v218
    %v224 = vmul.f32 %v187, %v209
    %v225 = vmul.f32 %v189, %v223
    %v227 = vsel %vm177, %v224, 0
    %v230 = vsel %vm177, %v225, 0
    %232 = vmatpush.msra.mxu0 0.0
    %233 = vmatpush.msra.mxu0 0.0
    %234 = vmatpush.msra.mxu0 0.0
    %235 = vmatpush.msra.mxu0 0.0
    %236 = vmatpush.msra.mxu0 0.0
    %237 = vmatpush.msra.mxu0 0.0
    %238 = vmatpush.msra.mxu0 0.0
    %239 = vmatpush.msra.mxu0 0.0
    %240 = vmatpush.msra.mxu0 0.0
    %241 = vmatpush.msra.mxu0 0.0
    %242 = vmatpush.msra.mxu0 0.0
    %243 = vmatpush.msra.mxu0 0.0
    %244 = vmatpush.msra.mxu0 0.0
    %245 = vmatpush.msra.mxu0 0.0
    %246 = vmatpush.msra.mxu0 %v150
    %247 = vmatpush.msra.mxu0 %v147
    %248 = vmatmul.f32.gmra.mxu0 %v227
    %v249 = vpop.f32.mrf.mxu0
    %v250 = vadd.f32 0.0, %v249
    %251 = vmatmul.f32.gmra.mxu0 %v230
    %v252 = vpop.f32.mrf.mxu0
    %v253 = vadd.f32 0.0, %v252
    %254 = vdwg.mxu0
    %255 = vst.msk [vmem:[#allocation8] sm:$0xff] %vm177, %v250
    %256 = vst.msk [vmem:[#allocation8 + $0x8] sm:$0xff] %vm177, %v253
    // Predicated region
    $region26: #{tpu_custom_call.1} parent=1 // pred_check
      _
    $region27: #{tpu_custom_call.1} parent=1 // pred_check_branch
      %258 = sbr.rel (0) target = $region29
    $region28: #{tpu_custom_call.1} parent=1 // pred_region
      %260 = vsyncadd [#allocation4], 0
      %s261 = sshll.u32 [#allocation8], 4
      %s262 = int_to_ptr.vmem [resolvable:$true] %s261
      %s263 = sshll.u32 %s3, 4
      %s264 = int_to_ptr.hbm [resolvable:$true] %s263
      %269 = dma.vmem_to_hbm [thread:$0]  %s262, 256, %s264, [#allocation4], 128, 128, 8
    $region29: #{tpu_custom_call.1} parent=1 // pred_fallthru
      _
    // Predicated region
    $region30: #{tpu_custom_call.1} parent=1 // pred_check
      _
    $region31: #{tpu_custom_call.1} parent=1 // pred_check_branch
      %271 = sbr.rel (0) target = $region33
    $region32: #{tpu_custom_call.1} parent=1 // pred_region
      %273 = dma.done [#allocation4], 256
    $region33: #{tpu_custom_call.1} parent=1 // pred_fallthru
      _
    %274 = vsyncpa [#allocation3], 1
    %275 = vsyncpa [#allocation6], 1
    %276 = vsyncpa [#allocation4], 1

</llo_original>
